<compile_context>
chip_gen: v7x
topology: tpu7x:2x2x1
jax: 0.10.0
libtpu: 0.0.40
codegen_flags: <defaults>
</compile_context>

<pallas_src>
import functools

import jax
import jax.numpy as jnp
from jax.experimental import pallas as pl
from jax.experimental.pallas import tpu as pltpu


# ~1 MiB of f32 per block: big enough to hit >85% of HBM roofline, small
# enough that (inputs + output) x double-buffering fits every generation's
# default scoped-VMEM limit (incl. v5e's 16 MiB and v7x's 64 MiB total VMEM).
_TARGET_BLOCK_ELEMS = 256 * 1024


def _choose_layout(n):
    """Pick a lane-dense 2D slab (rows, lanes), block rows, and pad amount."""

    def pick_block_rows(rows, lanes):
        if rows * lanes <= _TARGET_BLOCK_ELEMS:
            return rows  # single full-array block (exempt from (8,128) rule)
        if rows % 8:
            return None
        max_br = max(8, _TARGET_BLOCK_ELEMS // lanes)  # multiple of 8
        for cand in range(max_br, 7, -8):
            if rows % cand == 0:
                return cand
        return 8

    # Prefer the widest lane count that divides n exactly -> no padding and an
    # unmasked, lane-dense output store.
    for lanes in (2048, 1024, 512, 256, 128):
        if n % lanes == 0:
            br = pick_block_rows(n // lanes, lanes)
            if br is not None:
                return n // lanes, lanes, br, 0

    # Rare fallback for awkward sizes: pad the flat length to a multiple of
    # (8, 128) and tile that.
    lanes = 128
    padded = -(-n // (8 * lanes)) * (8 * lanes)
    rows = padded // lanes
    return rows, lanes, pick_block_rows(rows, lanes), padded - n


def _gd_prng_kernel(seed_ref, x_ref, o_ref, *, alpha):
    """TPU path: hardware PRNG, normals generated in-kernel."""
    # prng_seed hashes all of its arguments together -> independent streams
    # per tile without adjacent-integer seeds.
    pltpu.prng_seed(seed_ref[0], pl.program_id(0))
    z = pltpu.stateful_normal(x_ref.shape, jnp.float32)
    eps = z * jnp.float32(alpha) + jnp.float32(1.0)
    o_ref[...] = (x_ref[...].astype(jnp.float32) * eps).astype(o_ref.dtype)


def _gd_mul_kernel(x_ref, z_ref, o_ref, *, alpha):
    """Portable path: normals precomputed, fused affine + multiply."""
    eps = z_ref[...] * jnp.float32(alpha) + jnp.float32(1.0)
    o_ref[...] = (x_ref[...].astype(jnp.float32) * eps).astype(o_ref.dtype)


def gaussian_dropout(x, seed, alpha=1.0, training=True):
    """Pallas GaussianDropout forward: x * (N(0,1)*alpha + 1).

    In eval mode returns x unchanged (unreachable in the reference module,
    kept for completeness).
    """
    if not training:
        return x

    orig_shape = x.shape
    dtype = x.dtype
    n = x.size

    rows, lanes, block_rows, pad = _choose_layout(n)

    flat = x.reshape(-1)
    if pad:
        flat = jnp.pad(flat, (0, pad))
    x2d = flat.reshape(rows, lanes)
    grid = (rows // block_rows,)

    # Independent per-tile reseeding -> safe to mark the grid axis parallel
    # (shards across both TensorCores on v7x; neutral on v5e/v6e).
    cparams = pltpu.CompilerParams(dimension_semantics=("parallel",))

    if jax.default_backend() == "tpu":
        kernel = functools.partial(_gd_prng_kernel, alpha=float(alpha))
        seed_arr = jnp.asarray([seed], dtype=jnp.int32)
        out2d = pl.pallas_call(
            kernel,
            out_shape=jax.ShapeDtypeStruct((rows, lanes), dtype),
            grid_spec=pltpu.PrefetchScalarGridSpec(
                num_scalar_prefetch=1,
                grid=grid,
                in_specs=[pl.BlockSpec((block_rows, lanes),
                                       lambda i, seed: (i, 0))],
                out_specs=pl.BlockSpec((block_rows, lanes),
                                       lambda i, seed: (i, 0)),
            ),
            compiler_params=cparams,
        )(seed_arr, x2d)
    else:
        # TODO(synk): pltpu.prng_seed / stateful_normal have no CPU/interpret
        # lowering; on non-TPU backends draw the normals with jax.random and
        # only fuse the elementwise math in the kernel.
        z2d = jax.random.normal(jax.random.PRNGKey(seed), (rows, lanes),
                                dtype=jnp.float32)
        kernel = functools.partial(_gd_mul_kernel, alpha=float(alpha))
        out2d = pl.pallas_call(
            kernel,
            out_shape=jax.ShapeDtypeStruct((rows, lanes), dtype),
            grid=grid,
            in_specs=[pl.BlockSpec((block_rows, lanes), lambda i: (i, 0)),
                      pl.BlockSpec((block_rows, lanes), lambda i: (i, 0))],
            out_specs=pl.BlockSpec((block_rows, lanes), lambda i: (i, 0)),
            compiler_params=cparams,
        )(x2d, z2d)

    out_flat = out2d.reshape(-1)
    if pad:
        out_flat = out_flat[:n]
    return out_flat.reshape(orig_shape)


if __name__ == "__main__":
    key = jax.random.PRNGKey(0)
    # NCHW input, matching the PyTorch convention.
    x = jax.random.normal(key, (2, 4, 16, 16), dtype=jnp.float32)

    y = gaussian_dropout(x, seed=1234, alpha=1.0, training=True)
    y = jax.block_until_ready(y)

    assert y.shape == x.shape
    assert y.dtype == x.dtype
    assert bool(jnp.all(jnp.isfinite(y)))

    # The noise is recoverable as eps = y / x; it should look like N(1, 1).
    eps = (y / x).reshape(-1)
    mean = float(jnp.mean(eps))
    std = float(jnp.std(eps))
    assert abs(mean - 1.0) < 0.25, f"eps mean off: {mean}"
    assert 0.6 < std < 1.4, f"eps std off: {std}"

    print("KERNEL_OK")
</pallas_src>

<mosaic_0001>
module attributes {stable_mosaic.version = 11 : i64} {
  func.func @_gd_mul_kernel(%arg0: i32, %arg1: memref<1x2048xf32, #tpu.memory_space<vmem>>, %arg2: memref<1x2048xf32, #tpu.memory_space<vmem>>, %arg3: memref<1x2048xf32, #tpu.memory_space<vmem>>) attributes {dimension_semantics = [#tpu.dimension_semantics<parallel>], iteration_bounds = array<i64: 1>, scalar_prefetch = 0 : i64, scratch_operands = 0 : i64, tpu.core_type = #tpu.core_type<tc>, window_params = [{transform_indices = @transform_0, window_bounds = array<i64: 1, 2048>}, {transform_indices = @transform_1, window_bounds = array<i64: 1, 2048>}, {transform_indices = @transform_2, window_bounds = array<i64: 1, 2048>}]} {
    %c0 = arith.constant 0 : index
    %c0_0 = arith.constant 0 : index
    %0 = vector.load %arg2[%c0, %c0_0] : memref<1x2048xf32, #tpu.memory_space<vmem>>, vector<1x2048xf32>
    %cst = arith.constant 1.000000e+00 : f32
    %1 = vector.broadcast %cst : f32 to vector<1x2048xf32>
    %2 = arith.mulf %0, %1 : vector<1x2048xf32>
    %cst_1 = arith.constant 1.000000e+00 : f32
    %3 = vector.broadcast %cst_1 : f32 to vector<1x2048xf32>
    %4 = arith.addf %2, %3 : vector<1x2048xf32>
    %c0_2 = arith.constant 0 : index
    %c0_3 = arith.constant 0 : index
    %5 = vector.load %arg1[%c0_2, %c0_3] : memref<1x2048xf32, #tpu.memory_space<vmem>>, vector<1x2048xf32>
    %6 = arith.mulf %5, %4 : vector<1x2048xf32>
    %c0_4 = arith.constant 0 : index
    %c0_5 = arith.constant 0 : index
    %7 = vector.load %arg3[%c0_4, %c0_5] : memref<1x2048xf32, #tpu.memory_space<vmem>>, vector<1x2048xf32>
    tpu.vector_store %arg3[%c0_4, %c0_5], %6 {strides = array<i32>} : memref<1x2048xf32, #tpu.memory_space<vmem>>, vector<1x2048xf32>,
    return
  }
  func.func @transform_0(%arg0: i32) -> (i32, i32) {
    %c0_i32 = arith.constant 0 : i32
    %c0_i32_0 = arith.constant 0 : i32
    return %arg0, %c0_i32 : i32, i32
  }
  func.func @transform_1(%arg0: i32) -> (i32, i32) {
    %c0_i32 = arith.constant 0 : i32
    %c0_i32_0 = arith.constant 0 : i32
    return %arg0, %c0_i32 : i32, i32
  }
  func.func @transform_2(%arg0: i32) -> (i32, i32) {
    %c0_i32 = arith.constant 0 : i32
    %c0_i32_0 = arith.constant 0 : i32
    return %arg0, %c0_i32 : i32, i32
  }
}

</mosaic_0001>

<llo_original>
// kernel: tpu_custom_call.1
$region0: #{tpu_custom_call.1}
  #allocation0 [shape = 'u32[]', space=smem, size = 0x4, offset = 0x4, fixed_abs, tag = 'smem constant byte address 0x4 - core index']
  #allocation1 [shape = 'u32[144,128]{1,0:T(1,128)}', space=vmem, size = 0x12000, scoped, tag = 'internal scratch']
  %s0 = inlined_call_operand.hbm [shape: f32[1,2048], index: 0, kind: input, shape index: {}]
  %s1 = inlined_call_operand.hbm [shape: f32[1,2048], index: 1, kind: input, shape index: {}]
  %s2 = inlined_call_operand.hbm [shape: f32[1,2048], index: 2, kind: output, shape index: {}]
  %s3 = sld [smem:[#allocation0]]
  $region26: #{tpu_custom_call.1} parent=0
    _
  %s5 = ssub.s32 1, %s3
  %s6 = scalar_select 0, %s5, %s3
  $region1: #{tpu_custom_call.1} parent=0
    #allocation2 [shape = 'u8[8192]{0}', space=vmem, size = 0x2000, scoped, tag = 'input window, operand 0, single buffered']
    #allocation3 [shape = 's32[1]{0}', space=sflag, size = 0x4, scoped, tag = 'scoped memory for tpu_custom_call.1']
    #allocation4 [shape = 's32[1]{0}', space=sflag, size = 0x4, scoped, tag = 'scoped memory for tpu_custom_call.1']
    #allocation5 [shape = 'u8[8192]{0}', space=vmem, size = 0x2000, scoped, tag = 'input window, operand 1, single buffered']
    #allocation6 [shape = 's32[1]{0}', space=sflag, size = 0x4, scoped, tag = 'scoped memory for tpu_custom_call.1']
    #allocation7 [shape = 'u8[8192]{0}', space=vmem, size = 0x2000, scoped, tag = 'output window, operand 0, single buffered']
    %7 = vsyncpa [#allocation3], 0
    %8 = vsyncpa [#allocation6], 0
    %9 = vsyncpa [#allocation4], 0
    // Predicated region
    $region2: #{tpu_custom_call.1} parent=1 // pred_check
      _
    $region3: #{tpu_custom_call.1} parent=1 // pred_check_branch
      %11 = sbr.rel (0) target = $region5
    $region4: #{tpu_custom_call.1} parent=1 // pred_region
      %s13 = ssub.s32 256, 256
      %14 = vsyncadd [#allocation3], %s13
      %s16 = sshll.u32 [#allocation2], 4
      %s17 = int_to_ptr.vmem [resolvable:$true] %s16
      %19 = dma.hbm_to_vmem [thread:$0]  %s0, 256, %s17, [#allocation3]
    $region5: #{tpu_custom_call.1} parent=1 // pred_fallthru
      _
    // Predicated region
    $region6: #{tpu_custom_call.1} parent=1 // pred_check
      _
    $region7: #{tpu_custom_call.1} parent=1 // pred_check_branch
      %21 = sbr.rel (0) target = $region9
    $region8: #{tpu_custom_call.1} parent=1 // pred_region
      %s23 = ssub.s32 256, 256
      %24 = vsyncadd [#allocation6], %s23
      %s26 = sshll.u32 [#allocation5], 4
      %s27 = int_to_ptr.vmem [resolvable:$true] %s26
      %29 = dma.hbm_to_vmem [thread:$0]  %s1, 256, %s27, [#allocation6]
    $region9: #{tpu_custom_call.1} parent=1 // pred_fallthru
      _
    // Predicated region
    $region10: #{tpu_custom_call.1} parent=1 // pred_check
      _
    $region11: #{tpu_custom_call.1} parent=1 // pred_check_branch
      %31 = sbr.rel (0) target = $region13
    $region12: #{tpu_custom_call.1} parent=1 // pred_region
      %32 = dma.done [#allocation3], 256
    $region13: #{tpu_custom_call.1} parent=1 // pred_fallthru
      _
    // Predicated region
    $region14: #{tpu_custom_call.1} parent=1 // pred_check
      _
    $region15: #{tpu_custom_call.1} parent=1 // pred_check_branch
      %34 = sbr.rel (0) target = $region17
    $region16: #{tpu_custom_call.1} parent=1 // pred_region
      %35 = dma.done [#allocation6], 256
    $region17: #{tpu_custom_call.1} parent=1 // pred_fallthru
      _
    %v36 = vld [vmem:[#allocation5] sm:$0xff]
    %v37 = vld [vmem:[#allocation5 + $0x8] sm:$0xff]
    %v38 = vadd.f32 %v36, 1.0
    %v39 = vadd.f32 %v37, 1.0
    %v40 = vld [vmem:[#allocation2] sm:$0xff]
    %v41 = vld [vmem:[#allocation2 + $0x8] sm:$0xff]
    %v42 = vmul.f32 %v40, %v38
    %v43 = vmul.f32 %v41, %v39
    %44 = vst [vmem:[#allocation7] sm:$0xff] %v42
    %45 = vst [vmem:[#allocation7 + $0x8] sm:$0xff] %v43
    // Predicated region
    $region18: #{tpu_custom_call.1} parent=1 // pred_check
      _
    $region19: #{tpu_custom_call.1} parent=1 // pred_check_branch
      %47 = sbr.rel (0) target = $region21
    $region20: #{tpu_custom_call.1} parent=1 // pred_region
      %s49 = ssub.s32 256, 256
      %50 = vsyncadd [#allocation4], %s49
      %s52 = sshll.u32 [#allocation7], 4
      %s53 = int_to_ptr.vmem [resolvable:$true] %s52
      %55 = dma.vmem_to_hbm [thread:$0]  %s53, 256, %s2, [#allocation4]
    $region21: #{tpu_custom_call.1} parent=1 // pred_fallthru
      _
    // Predicated region
    $region22: #{tpu_custom_call.1} parent=1 // pred_check
      _
    $region23: #{tpu_custom_call.1} parent=1 // pred_check_branch
      %57 = sbr.rel (0) target = $region25
    $region24: #{tpu_custom_call.1} parent=1 // pred_region
      %58 = dma.done [#allocation4], 256
    $region25: #{tpu_custom_call.1} parent=1 // pred_fallthru
      _
    %59 = vsyncpa [#allocation3], 1
    %60 = vsyncpa [#allocation6], 1
    %61 = vsyncpa [#allocation4], 1

</llo_original>
